<compile_context>
chip_gen: v7x
topology: tpu7x:2x2x1
jax: 0.10.0
libtpu: 0.0.40
codegen_flags: <defaults>
</compile_context>

<pallas_src>
import jax
import jax.numpy as jnp
from jax.experimental import pallas as pl
from jax.experimental.pallas import tpu as pltpu

# Logical sizes (from the PyTorch module) and 128-lane-padded N dims.
IN_F, HID_F, OUT_F = 200, 100, 50
HID_P, OUT_P = 128, 128

# Bias rows inside the packed (8, 128) bias array.
_B1, _B2, _B3, _BMU, _BSIG = 0, 1, 2, 3, 4


def _round_up(n, m):
    return (n + m - 1) // m * m


# ---------------------------------------------------------------------------
# Kernels (one per phase so no unused operand is ever DMA'd into VMEM)
# ---------------------------------------------------------------------------
def _encoder(x, w1_ref, w2_ref, w3_ref, bias_ref):
    h = jnp.maximum(
        jnp.dot(x, w1_ref[...], preferred_element_type=jnp.float32)
        + bias_ref[_B1:_B1 + 1, :], 0.0)
    h = jnp.maximum(
        jnp.dot(h, w2_ref[...], preferred_element_type=jnp.float32)
        + bias_ref[_B2:_B2 + 1, :], 0.0)
    return (jnp.dot(h, w3_ref[...], preferred_element_type=jnp.float32)
            + bias_ref[_B3:_B3 + 1, :])


def _mu_branch(mu, wmu_ref, bias_ref):
    return (jnp.dot(mu, wmu_ref[...], preferred_element_type=jnp.float32)
            + bias_ref[_BMU:_BMU + 1, :])


def _phase0_kernel(mu_ref, wmu_ref, bias_ref, out_ref):
    mu_enc = _mu_branch(mu_ref[...], wmu_ref, bias_ref)   # torch.add(mu_enc, 0)
    out_ref[...] = mu_enc[:, :OUT_F].astype(out_ref.dtype)


def _phase1_kernel(x_ref, mu_ref, w1_ref, w2_ref, w3_ref, wmu_ref, bias_ref,
                   out_ref):
    enc = _encoder(x_ref[...], w1_ref, w2_ref, w3_ref, bias_ref)
    mu_enc = _mu_branch(mu_ref[...], wmu_ref, bias_ref)
    out_ref[...] = (enc + mu_enc)[:, :OUT_F].astype(out_ref.dtype)


def _phase2_kernel(x_ref, mu_ref, s2_ref, w1_ref, w2_ref, w3_ref, wmu_ref,
                   wsig_ref, bias_ref, out_ref):
    enc = _encoder(x_ref[...], w1_ref, w2_ref, w3_ref, bias_ref)
    # Matches torch.sqrt exactly (no clamp); sqrt kept in f32 (v5e EUP has no bf16).
    sigma = jnp.sqrt(s2_ref[...].astype(jnp.float32))
    sig_enc = (jnp.dot(sigma, wsig_ref[...], preferred_element_type=jnp.float32)
               + bias_ref[_BSIG:_BSIG + 1, :])
    # TODO(synk): PyTorch forward does `print(sigma_encoded)` here; no clean
    # host-side tensor print from inside a Pallas kernel, so it is omitted.
    enc = enc * sig_enc
    mu_enc = _mu_branch(mu_ref[...], wmu_ref, bias_ref)
    out_ref[...] = (enc + mu_enc)[:, :OUT_F].astype(out_ref.dtype)


# ---------------------------------------------------------------------------
# Parameter packing: pad only the N (output) dim of each weight to 128 lanes;
# the K dim of the 200-wide first-layer weights stays unpadded.  All five
# biases are folded into one (8, 128) resident array.
# ---------------------------------------------------------------------------
def pack_params(params, weight_dtype=jnp.float32):
    def pad_n(w):
        k, n = w.shape
        out = jnp.zeros((k, _round_up(n, 128)), weight_dtype)
        return out.at[:, :n].set(w.astype(weight_dtype))

    biases = jnp.zeros((8, 128), jnp.float32)
    biases = biases.at[_B1, :HID_F].set(params["b1"].reshape(-1))
    biases = biases.at[_B2, :HID_F].set(params["b2"].reshape(-1))
    biases = biases.at[_B3, :OUT_F].set(params["b3"].reshape(-1))
    biases = biases.at[_BMU, :OUT_F].set(params["b_mu"].reshape(-1))
    biases = biases.at[_BSIG, :OUT_F].set(params["b_sig"].reshape(-1))

    # w2 / w3 need zero K rows up to 128 because the hidden activations carry
    # 128 lanes (the last 28 are exact zeros) after the padded-N w1 matmul.
    w2 = jnp.zeros((HID_P, HID_P), weight_dtype).at[:HID_F, :HID_F].set(
        params["w2"].astype(weight_dtype))
    w3 = jnp.zeros((HID_P, OUT_P), weight_dtype).at[:HID_F, :OUT_F].set(
        params["w3"].astype(weight_dtype))

    return dict(
        w1=pad_n(params["w1"]),        # (200, 128)
        w2=w2,                         # (128, 128)
        w3=w3,                         # (128, 128)
        w_mu=pad_n(params["w_mu"]),    # (200, 128)
        w_sig=pad_n(params["w_sig"]),  # (200, 128)
        biases=biases,                 # (8, 128)
    )


# ---------------------------------------------------------------------------
# Wrapper
# ---------------------------------------------------------------------------
def gas_net_forward(packed, x, mu_vector, sigma2_vector, phase, *,
                    batch_tile=512, vmem_limit_bytes=32 * 1024 * 1024):
    """Pallas-backed GAS_Net.forward.  `phase` must be a static Python int.
    `packed` is the output of pack_params().  Batched inputs may be float32 or
    bfloat16 (bf16 halves the dominant input DMA; accumulation stays f32).

    Tuning notes per generation:
      * v7x : keep vmem_limit_bytes at 32 MiB (64 MiB physical / TC).
      * v6e : for very large B, raise vmem_limit_bytes to 64-96 MiB and
              batch_tile to 1024-2048.
      * v5e : the explicit vmem_limit_bytes override is required for
              batch_tile >= 512 (default scoped limit is only 16 MiB).
    """
    assert phase in (0, 1, 2)
    B = mu_vector.shape[0]

    # Batch tile: multiple of 8; capped so the grid has >= 2 steps when the
    # batch allows it (v7x megacore sharding of the "parallel" axis).
    TB = min(batch_tile, _round_up(B, 8))
    if B > 8:
        TB = min(TB, _round_up(-(-B // 2), 8))
    TB = max(TB, 8)
    grid = (pl.cdiv(B, TB),)

    def batched(feat):                        # raw, unpadded batch tiles
        return pl.BlockSpec((TB, feat), lambda i: (i, 0))

    def resident(shape):                      # constant index_map -> stays in VMEM
        return pl.BlockSpec(shape, lambda i: (0, 0))

    if phase == 0:
        kernel = _phase0_kernel
        operands = (mu_vector, packed["w_mu"], packed["biases"])
        in_specs = [batched(IN_F), resident((IN_F, OUT_P)), resident((8, 128))]
        flops = 2 * B * IN_F * OUT_P
        transcendentals = 0
    elif phase == 1:
        kernel = _phase1_kernel
        operands = (x, mu_vector, packed["w1"], packed["w2"], packed["w3"],
                    packed["w_mu"], packed["biases"])
        in_specs = [batched(IN_F), batched(IN_F),
                    resident((IN_F, HID_P)), resident((HID_P, HID_P)),
                    resident((HID_P, OUT_P)), resident((IN_F, OUT_P)),
                    resident((8, 128))]
        flops = 2 * B * (IN_F * HID_P + HID_P * HID_P + HID_P * OUT_P
                         + IN_F * OUT_P)
        transcendentals = 0
    else:
        kernel = _phase2_kernel
        operands = (x, mu_vector, sigma2_vector, packed["w1"], packed["w2"],
                    packed["w3"], packed["w_mu"], packed["w_sig"],
                    packed["biases"])
        in_specs = [batched(IN_F), batched(IN_F), batched(IN_F),
                    resident((IN_F, HID_P)), resident((HID_P, HID_P)),
                    resident((HID_P, OUT_P)), resident((IN_F, OUT_P)),
                    resident((IN_F, OUT_P)), resident((8, 128))]
        flops = (2 * B * (IN_F * HID_P + HID_P * HID_P + HID_P * OUT_P
                          + 2 * IN_F * OUT_P) + 2 * B * OUT_P)
        transcendentals = B * IN_F

    bytes_accessed = (sum(int(o.size) * o.dtype.itemsize for o in operands)
                      + B * OUT_F * 4)

    return pl.pallas_call(
        kernel,
        out_shape=jax.ShapeDtypeStruct((B, OUT_F), jnp.float32),
        grid=grid,
        in_specs=in_specs,
        out_specs=pl.BlockSpec((TB, OUT_F), lambda i: (i, 0)),
        compiler_params=pltpu.CompilerParams(
            dimension_semantics=("parallel",),       # megacore sharding on v7x
            vmem_limit_bytes=vmem_limit_bytes),
        cost_estimate=pl.CostEstimate(flops=flops,
                                      transcendentals=transcendentals,
                                      bytes_accessed=bytes_accessed),
    )(*operands)


# ---------------------------------------------------------------------------
# Deterministic parameter init (mimics nn.Linear's U(-1/sqrt(fan_in), +..))
# ---------------------------------------------------------------------------
def init_params(key):
    def linear(k, fan_in, fan_out):
        kw, kb = jax.random.split(k)
        bound = 1.0 / jnp.sqrt(jnp.float32(fan_in))
        w = jax.random.uniform(kw, (fan_in, fan_out), jnp.float32, -bound, bound)
        b = jax.random.uniform(kb, (fan_out,), jnp.float32, -bound, bound)
        return w, b

    keys = jax.random.split(key, 5)
    w1, b1 = linear(keys[0], 200, 100)
    w2, b2 = linear(keys[1], 100, 100)
    w3, b3 = linear(keys[2], 100, 50)
    w_sig, b_sig = linear(keys[3], 200, 50)
    w_mu, b_mu = linear(keys[4], 200, 50)
    return dict(w1=w1, b1=b1, w2=w2, b2=b2, w3=w3, b3=b3,
                w_sig=w_sig, b_sig=b_sig, w_mu=w_mu, b_mu=b_mu)


# ---------------------------------------------------------------------------
# Pure-JAX reference (unpadded) for a sanity check
# ---------------------------------------------------------------------------
def reference_forward(params, x, mu_vector, sigma2_vector, phase):
    mu_enc = mu_vector @ params["w_mu"] + params["b_mu"]
    if phase == 0:
        return mu_enc + 0.0
    h = jnp.maximum(x @ params["w1"] + params["b1"], 0.0)
    h = jnp.maximum(h @ params["w2"] + params["b2"], 0.0)
    enc = h @ params["w3"] + params["b3"]
    if phase == 2:
        sig_enc = jnp.sqrt(sigma2_vector) @ params["w_sig"] + params["b_sig"]
        enc = enc * sig_enc
    return enc + mu_enc


# ---------------------------------------------------------------------------
if __name__ == "__main__":
    key = jax.random.PRNGKey(0)
    k_p, k_x, k_mu, k_s2 = jax.random.split(key, 4)

    params = init_params(k_p)
    packed = pack_params(params)

    ok = True
    # B=8: single grid step.  B=20: 2 grid steps with a ragged final block.
    for B in (8, 20):
        x = jax.random.normal(k_x, (B, IN_F), jnp.float32)
        mu_vector = jax.random.normal(k_mu, (B, IN_F), jnp.float32)
        sigma2_vector = jax.random.uniform(k_s2, (B, IN_F), jnp.float32,
                                           minval=0.1, maxval=2.0)
        for phase in (0, 1, 2):
            out = jax.block_until_ready(
                gas_net_forward(packed, x, mu_vector, sigma2_vector, phase))
            ref = reference_forward(params, x, mu_vector, sigma2_vector, phase)
            if out.shape != (B, OUT_F) or not jnp.allclose(out, ref,
                                                           atol=1e-4, rtol=1e-4):
                ok = False

    # bf16-input path (halves the dominant input DMA); loose tolerance vs the
    # f32 reference since the inputs themselves are rounded to bf16.
    B = 8
    x = jax.random.normal(k_x, (B, IN_F), jnp.float32)
    mu_vector = jax.random.normal(k_mu, (B, IN_F), jnp.float32)
    sigma2_vector = jax.random.uniform(k_s2, (B, IN_F), jnp.float32,
                                       minval=0.1, maxval=2.0)
    out_bf16 = jax.block_until_ready(
        gas_net_forward(packed,
                        x.astype(jnp.bfloat16),
                        mu_vector.astype(jnp.bfloat16),
                        sigma2_vector.astype(jnp.bfloat16), 2))
    ref = reference_forward(params, x, mu_vector, sigma2_vector, 2)
    if out_bf16.shape != (B, OUT_F) or not jnp.allclose(out_bf16, ref,
                                                        atol=0.1, rtol=0.1):
        ok = False

    print("KERNEL_OK" if ok else "KERNEL_MISMATCH")
</pallas_src>

<mosaic_0001>
module attributes {stable_mosaic.version = 11 : i64} {
  func.func @_phase0_kernel(%arg0: i32, %arg1: memref<8x200xf32, #tpu.memory_space<vmem>>, %arg2: memref<200x128xf32, #tpu.memory_space<vmem>>, %arg3: memref<8x128xf32, #tpu.memory_space<vmem>>, %arg4: memref<8x50xf32, #tpu.memory_space<vmem>>) attributes {dimension_semantics = [#tpu.dimension_semantics<parallel>], iteration_bounds = array<i64: 1>, scalar_prefetch = 0 : i64, scratch_operands = 0 : i64, tpu.core_type = #tpu.core_type<tc>, window_params = [{transform_indices = @transform_0, window_bounds = array<i64: 8, 200>}, {pipeline_mode = #tpu.pipeline_mode<synchronous>, transform_indices = @transform_1, window_bounds = array<i64: 200, 128>}, {pipeline_mode = #tpu.pipeline_mode<synchronous>, transform_indices = @transform_2, window_bounds = array<i64: 8, 128>}, {transform_indices = @transform_3, window_bounds = array<i64: 8, 50>}]} {
    %c0 = arith.constant 0 : index
    %c0_0 = arith.constant 0 : index
    %0 = vector.load %arg1[%c0, %c0_0] : memref<8x200xf32, #tpu.memory_space<vmem>>, vector<8x200xf32>
    %c0_1 = arith.constant 0 : index
    %c0_2 = arith.constant 0 : index
    %1 = vector.load %arg2[%c0_1, %c0_2] : memref<200x128xf32, #tpu.memory_space<vmem>>, vector<200x128xf32>
    %cst = arith.constant dense<0.000000e+00> : vector<8x128xf32>
    %2 = tpu.matmul %0, %1, %cst {dimension_numbers = #tpu.dot_dimension_numbers<[1], [0], [0], [1], [0, 0, 1, 1], [], []>} : vector<8x200xf32>, vector<200x128xf32>, vector<8x128xf32> -> vector<8x128xf32>
    %c3 = arith.constant 3 : index
    %c0_3 = arith.constant 0 : index
    %3 = vector.load %arg3[%c3, %c0_3] : memref<8x128xf32, #tpu.memory_space<vmem>>, vector<1x128xf32>
    %4 = vector.broadcast %3 : vector<1x128xf32> to vector<8x128xf32>
    %5 = arith.addf %2, %4 : vector<8x128xf32>
    %6 = vector.extract_strided_slice %5 {offsets = [0, 0], sizes = [8, 50], strides = [1, 1]} : vector<8x128xf32> to vector<8x50xf32>
    %c0_4 = arith.constant 0 : index
    %c0_5 = arith.constant 0 : index
    %7 = vector.load %arg4[%c0_4, %c0_5] : memref<8x50xf32, #tpu.memory_space<vmem>>, vector<8x50xf32>
    tpu.vector_store %arg4[%c0_4, %c0_5], %6 {strides = array<i32>} : memref<8x50xf32, #tpu.memory_space<vmem>>, vector<8x50xf32>,
    return
  }
  func.func @transform_0(%arg0: i32) -> (i32, i32) {
    %c0_i32 = arith.constant 0 : i32
    %c0_i32_0 = arith.constant 0 : i32
    return %arg0, %c0_i32 : i32, i32
  }
  func.func @transform_1(%arg0: i32) -> (i32, i32) {
    %c0_i32 = arith.constant 0 : i32
    %c0_i32_0 = arith.constant 0 : i32
    %c0_i32_1 = arith.constant 0 : i32
    return %c0_i32, %c0_i32_0 : i32, i32
  }
  func.func @transform_2(%arg0: i32) -> (i32, i32) {
    %c0_i32 = arith.constant 0 : i32
    %c0_i32_0 = arith.constant 0 : i32
    %c0_i32_1 = arith.constant 0 : i32
    return %c0_i32, %c0_i32_0 : i32, i32
  }
  func.func @transform_3(%arg0: i32) -> (i32, i32) {
    %c0_i32 = arith.constant 0 : i32
    %c0_i32_0 = arith.constant 0 : i32
    return %arg0, %c0_i32 : i32, i32
  }
}

</mosaic_0001>

<llo_original>
// kernel: tpu_custom_call.1
$region0: #{tpu_custom_call.1}
  #allocation0 [shape = 'u32[]', space=smem, size = 0x4, offset = 0x4, fixed_abs, tag = 'smem constant byte address 0x4 - core index']
  #allocation1 [shape = 'u32[144,128]{1,0:T(1,128)}', space=vmem, size = 0x12000, scoped, tag = 'internal scratch']
  %s0 = inlined_call_operand.hbm [shape: f32[8,200], index: 0, kind: input, shape index: {}]
  %s1 = inlined_call_operand.hbm [shape: f32[200,128], index: 1, kind: input, shape index: {}]
  %s2 = inlined_call_operand.hbm [shape: f32[8,128], index: 2, kind: input, shape index: {}]
  %s3 = inlined_call_operand.hbm [shape: f32[8,50], index: 3, kind: output, shape index: {}]
  %s4 = sld [smem:[#allocation0]]
  $region34: #{tpu_custom_call.1} parent=0
    _
  %s6 = ssub.s32 1, %s4
  %s7 = scalar_select 0, %s6, %s4
  $region1: #{tpu_custom_call.1} parent=0
    #allocation2 [shape = 'u8[8192]{0}', space=vmem, size = 0x2000, scoped, tag = 'input window, operand 0, single buffered']
    #allocation3 [shape = 's32[1]{0}', space=sflag, size = 0x4, scoped, tag = 'scoped memory for tpu_custom_call.1']
    #allocation4 [shape = 's32[1]{0}', space=sflag, size = 0x4, scoped, tag = 'scoped memory for tpu_custom_call.1']
    #allocation5 [shape = 'u8[102400]{0}', space=vmem, size = 0x19000, scoped, tag = 'input window, operand 1, single buffered']
    #allocation6 [shape = 's32[1]{0}', space=sflag, size = 0x4, scoped, tag = 'scoped memory for tpu_custom_call.1']
    #allocation7 [shape = 'u8[4096]{0}', space=vmem, size = 0x1000, scoped, tag = 'input window, operand 2, single buffered']
    #allocation8 [shape = 'u8[4096]{0}', space=vmem, size = 0x1000, scoped, tag = 'output window, operand 0, single buffered']
    %8 = vsyncpa [#allocation3], 0
    %9 = vsyncpa [#allocation6], 0
    %10 = vsyncpa [#allocation4], 0
    // Predicated region
    $region2: #{tpu_custom_call.1} parent=1 // pred_check
      _
    $region3: #{tpu_custom_call.1} parent=1 // pred_check_branch
      %12 = sbr.rel (0) target = $region5
    $region4: #{tpu_custom_call.1} parent=1 // pred_region
      %s14 = ssub.s32 256, 256
      %15 = vsyncadd [#allocation3], %s14
      %s17 = sshll.u32 [#allocation2], 4
      %s18 = int_to_ptr.vmem [resolvable:$true] %s17
      %20 = dma.hbm_to_vmem [thread:$0]  %s0, 256, %s18, [#allocation3]
    $region5: #{tpu_custom_call.1} parent=1 // pred_fallthru
      _
    // Predicated region
    $region6: #{tpu_custom_call.1} parent=1 // pred_check
      _
    $region7: #{tpu_custom_call.1} parent=1 // pred_check_branch
      %22 = sbr.rel (0) target = $region9
    $region8: #{tpu_custom_call.1} parent=1 // pred_region
      %s24 = ssub.s32 3200, 3200
      %25 = vsyncadd [#allocation6], %s24
      %s26 = sshll.u32 [#allocation5], 4
      %s27 = int_to_ptr.vmem [resolvable:$true] %s26
      %32 = dma.hbm_to_vmem [thread:$0]  %s1, 3200, %s27, [#allocation6], 128, 128, 8
    $region9: #{tpu_custom_call.1} parent=1 // pred_fallthru
      _
    // Predicated region
    $region10: #{tpu_custom_call.1} parent=1 // pred_check
      _
    $region11: #{tpu_custom_call.1} parent=1 // pred_check_branch
      %34 = sbr.rel (0) target = $region13
    $region12: #{tpu_custom_call.1} parent=1 // pred_region
      %s36 = ssub.s32 128, 128
      %37 = vsyncadd [#allocation6], %s36
      %s39 = sshll.u32 [#allocation7], 4
      %s40 = int_to_ptr.vmem [resolvable:$true] %s39
      %42 = dma.hbm_to_vmem [thread:$0]  %s2, 128, %s40, [#allocation6]
    $region13: #{tpu_custom_call.1} parent=1 // pred_fallthru
      _
    // Predicated region
    $region14: #{tpu_custom_call.1} parent=1 // pred_check
      _
    $region15: #{tpu_custom_call.1} parent=1 // pred_check_branch
      %44 = sbr.rel (0) target = $region17
    $region16: #{tpu_custom_call.1} parent=1 // pred_region
      %45 = dma.done [#allocation3], 256
    $region17: #{tpu_custom_call.1} parent=1 // pred_fallthru
      _
    // Predicated region
    $region18: #{tpu_custom_call.1} parent=1 // pred_check
      _
    $region19: #{tpu_custom_call.1} parent=1 // pred_check_branch
      %47 = sbr.rel (0) target = $region21
    $region20: #{tpu_custom_call.1} parent=1 // pred_region
      %48 = dma.done [#allocation6], 3200
    $region21: #{tpu_custom_call.1} parent=1 // pred_fallthru
      _
    // Predicated region
    $region22: #{tpu_custom_call.1} parent=1 // pred_check
      _
    $region23: #{tpu_custom_call.1} parent=1 // pred_check_branch
      %50 = sbr.rel (0) target = $region25
    $region24: #{tpu_custom_call.1} parent=1 // pred_region
      %51 = dma.done [#allocation6], 128
    $region25: #{tpu_custom_call.1} parent=1 // pred_fallthru
      _
    %v52 = vld [vmem:[#allocation2] sm:$0xff]
    %v53 = vld [vmem:[#allocation2 + $0x8] sm:$0xff]
    %v54 = vld [vmem:[#allocation5] sm:$0xff]
    %v55 = vld [vmem:[#allocation5 + $0x8] sm:$0xff]
    %v56 = vld [vmem:[#allocation5 + $0x10] sm:$0xff]
    %v57 = vld [vmem:[#allocation5 + $0x18] sm:$0xff]
    %v58 = vld [vmem:[#allocation5 + $0x20] sm:$0xff]
    %v59 = vld [vmem:[#allocation5 + $0x28] sm:$0xff]
    %v60 = vld [vmem:[#allocation5 + $0x30] sm:$0xff]
    %v61 = vld [vmem:[#allocation5 + $0x38] sm:$0xff]
    %v62 = vld [vmem:[#allocation5 + $0x40] sm:$0xff]
    %v63 = vld [vmem:[#allocation5 + $0x48] sm:$0xff]
    %v64 = vld [vmem:[#allocation5 + $0x50] sm:$0xff]
    %v65 = vld [vmem:[#allocation5 + $0x58] sm:$0xff]
    %v66 = vld [vmem:[#allocation5 + $0x60] sm:$0xff]
    %v67 = vld [vmem:[#allocation5 + $0x68] sm:$0xff]
    %v68 = vld [vmem:[#allocation5 + $0x70] sm:$0xff]
    %v69 = vld [vmem:[#allocation5 + $0x78] sm:$0xff]
    %v70 = vld [vmem:[#allocation5 + $0x80] sm:$0xff]
    %v71 = vld [vmem:[#allocation5 + $0x88] sm:$0xff]
    %v72 = vld [vmem:[#allocation5 + $0x90] sm:$0xff]
    %v73 = vld [vmem:[#allocation5 + $0x98] sm:$0xff]
    %v74 = vld [vmem:[#allocation5 + $0xa0] sm:$0xff]
    %v75 = vld [vmem:[#allocation5 + $0xa8] sm:$0xff]
    %v76 = vld [vmem:[#allocation5 + $0xb0] sm:$0xff]
    %v77 = vld [vmem:[#allocation5 + $0xb8] sm:$0xff]
    %v78 = vld [vmem:[#allocation5 + $0xc0] sm:$0xff]
    %v79 = vld [vmem:[#allocation7 + $0x3] sm:$0x1]
    %v80 = vlaneseq
    %v81 = vshrl.u32 %v80, 7
    %v82 = vsub.s32 0, %v81
    %v83 = vrot.slane %v79, %v82
    %vm84 = vcmask 588800
    %v86 = vsel %vm84, %v53, 0
    %88 = vmatprep.subr.mxu0 0.0
    %89 = vmatpush1.msra.mxu0 %v54
    %90 = vmatprep.subr.mxu0 0.0
    %91 = vmatpush1.msra.mxu0 %v55
    %92 = vmatprep.subr.mxu0 0.0
    %93 = vmatpush1.msra.mxu0 %v56
    %94 = vmatprep.subr.mxu0 0.0
    %95 = vmatpush1.msra.mxu0 %v57
    %96 = vmatprep.subr.mxu0 0.0
    %97 = vmatpush1.msra.mxu0 %v58
    %98 = vmatprep.subr.mxu0 0.0
    %99 = vmatpush1.msra.mxu0 %v59
    %100 = vmatprep.subr.mxu0 0.0
    %101 = vmatpush1.msra.mxu0 %v60
    %102 = vmatprep.subr.mxu0 0.0
    %103 = vmatpush1.msra.mxu0 %v61
    %104 = vmatprep.subr.mxu0 0.0
    %105 = vmatpush1.msra.mxu0 %v62
    %106 = vmatprep.subr.mxu0 0.0
    %107 = vmatpush1.msra.mxu0 %v63
    %108 = vmatprep.subr.mxu0 0.0
    %109 = vmatpush1.msra.mxu0 %v64
    %110 = vmatprep.subr.mxu0 0.0
    %111 = vmatpush1.msra.mxu0 %v65
    %112 = vmatprep.subr.mxu0 0.0
    %113 = vmatpush1.msra.mxu0 %v66
    %114 = vmatprep.subr.mxu0 0.0
    %115 = vmatpush1.msra.mxu0 %v67
    %116 = vmatprep.subr.mxu0 0.0
    %117 = vmatpush1.msra.mxu0 %v68
    %118 = vmatprep.subr.mxu0 0.0
    %119 = vmatpush1.msra.mxu0 %v69
    %120 = vmatprep.subr.mxu0 0.0
    %121 = vmatpush1.msra.mxu0 %v70
    %122 = vmatprep.subr.mxu0 0.0
    %123 = vmatpush1.msra.mxu0 %v71
    %124 = vmatprep.subr.mxu0 0.0
    %125 = vmatpush1.msra.mxu0 %v72
    %126 = vmatprep.subr.mxu0 0.0
    %127 = vmatpush1.msra.mxu0 %v73
    %128 = vmatprep.subr.mxu0 0.0
    %129 = vmatpush1.msra.mxu0 %v74
    %130 = vmatprep.subr.mxu0 0.0
    %131 = vmatpush1.msra.mxu0 %v75
    %132 = vmatprep.subr.mxu0 0.0
    %133 = vmatpush1.msra.mxu0 %v76
    %134 = vmatprep.subr.mxu0 0.0
    %135 = vmatpush1.msra.mxu0 %v77
    %136 = vmatprep.subr.mxu0 0.0
    %137 = vmatpush1.msra.mxu0 %v78
    %138 = vmatprep.subr.mxu0 0.0
    %139 = vmatpush1.msra.mxu0 0.0
    %140 = vmatprep.subr.mxu0 0.0
    %141 = vmatpush1.msra.mxu0 0.0
    %142 = vmatprep.subr.mxu0 0.0
    %143 = vmatpush1.msra.mxu0 0.0
    %144 = vmatprep.subr.mxu0 0.0
    %145 = vmatpush1.msra.mxu0 0.0
    %146 = vmatprep.subr.mxu0 0.0
    %147 = vmatpush1.msra.mxu0 0.0
    %148 = vmatprep.subr.mxu0 0.0
    %149 = vmatpush1.msra.mxu0 0.0
    %150 = vmatprep.subr.mxu0 0.0
    %151 = vmatpush1.msra.mxu0 0.0
    %152 = vmatprep.mubr.f32.mxu0 %v86
    %153 = vmatmul.mubr.f32.gmra.mrb[0].mxu0 %v52
    %v154 = vpop.f32.mrb[0].mxu0
    %v155 = vadd.f32 %v83, %v154
    %v156 = vpop.f32.mrb[0].mxu0
    %157 = vdwg.mxu0
    %vm158 = vcmask 408576
    %159 = vst.msk [vmem:[#allocation8] sm:$0xff] %vm158, %v155
    // Predicated region
    $region26: #{tpu_custom_call.1} parent=1 // pred_check
      _
    $region27: #{tpu_custom_call.1} parent=1 // pred_check_branch
      %161 = sbr.rel (0) target = $region29
    $region28: #{tpu_custom_call.1} parent=1 // pred_region
      %s163 = ssub.s32 128, 128
      %164 = vsyncadd [#allocation4], %s163
      %s166 = sshll.u32 [#allocation8], 4
      %s167 = int_to_ptr.vmem [resolvable:$true] %s166
      %169 = dma.vmem_to_hbm [thread:$0]  %s167, 128, %s3, [#allocation4]
    $region29: #{tpu_custom_call.1} parent=1 // pred_fallthru
      _
    // Predicated region
    $region30: #{tpu_custom_call.1} parent=1 // pred_check
      _
    $region31: #{tpu_custom_call.1} parent=1 // pred_check_branch
      %171 = sbr.rel (0) target = $region33
    $region32: #{tpu_custom_call.1} parent=1 // pred_region
      %172 = dma.done [#allocation4], 128
    $region33: #{tpu_custom_call.1} parent=1 // pred_fallthru
      _
    %173 = vsyncpa [#allocation3], 1
    %174 = vsyncpa [#allocation6], 1
    %175 = vsyncpa [#allocation4], 1

</llo_original>
